<compile_context>
chip_gen: v7x
topology: tpu7x:2x2x1
jax: 0.10.0
libtpu: 0.0.40
codegen_flags: <defaults>
</compile_context>

<pallas_src>
import jax
import jax.numpy as jnp
from jax.experimental import pallas as pl
from jax.experimental.pallas import tpu as pltpu


def _make_kernel(*, W, TH, Cin, Cout, fuse_taps):
    PW = TH * W                 # pixels per row tile (lane dim of the output)
    SW = (TH + 2) * W + 2       # strip width: 1 lead zero + (TH+2) rows + 1 slack

    def kernel(body_ref, top_ref, bot_ref, w_ref, b_ref, o_ref, strip_ref,
               *col_scratch):
        j = pl.program_id(1)
        nb = pl.num_programs(1)

        # ---- assemble the flattened halo strip (Cin, SW) in VMEM ------------
        # strip lane q (q >= 1) holds unpadded pixel (row = jTH - 1 + (q-1)//W,
        # col = (q-1)%W); rows outside the image stay zero (=> conv padding).
        strip_ref[...] = jnp.zeros_like(strip_ref)
        strip_ref[:, 1 + W:1 + (TH + 1) * W] = body_ref[...].astype(strip_ref.dtype)

        @pl.when(j > 0)
        def _():  # top halo row = last row of the previous row tile
            strip_ref[:, 1:1 + W] = top_ref[...].astype(strip_ref.dtype)

        @pl.when(j < nb - 1)
        def _():  # bottom halo row = first row of the next row tile
            strip_ref[:, 1 + (TH + 1) * W:1 + (TH + 2) * W] = (
                bot_ref[...].astype(strip_ref.dtype))

        # ---- left/right image-border lane masks (rows handled by zero halos) -
        lane = jax.lax.broadcasted_iota(jnp.int32, (1, PW), 1)
        if (W & (W - 1)) == 0:
            xpos = lane & (W - 1)
        else:
            xpos = lane % W
        not_left = xpos != 0          # tap dx == 0 invalid at image column 0
        not_right = xpos != (W - 1)   # tap dx == 2 invalid at image column W-1

        # ---- 9 taps as static lane-offset views of the strip ----------------
        acc = None
        for dy in range(3):
            for dx in range(3):
                idx = dy * 3 + dx
                off = dy * W + dx
                patch = strip_ref[:, off:off + PW]            # (Cin, PW)
                if dx == 0:
                    patch = jnp.where(not_left, patch, 0.0).astype(patch.dtype)
                elif dx == 2:
                    patch = jnp.where(not_right, patch, 0.0).astype(patch.dtype)
                if fuse_taps:
                    # lane-dense sublane-range store into the im2col slab
                    col_scratch[0][idx * Cin:(idx + 1) * Cin, :] = patch
                else:
                    contrib = jnp.dot(w_ref[:, idx * Cin:(idx + 1) * Cin], patch,
                                      preferred_element_type=jnp.float32)
                    acc = contrib if acc is None else acc + contrib

        if fuse_taps:
            # single fused MXU matmul over K = 9*Cin
            acc = jnp.dot(w_ref[...], col_scratch[0][...],
                          preferred_element_type=jnp.float32)

        out = jnp.maximum(acc + b_ref[...], 0.0)              # bias + ReLU (f32)
        o_ref[...] = out.astype(o_ref.dtype)

    return kernel


def _vmem_budget_and_limit():
    """Generation-aware (tile budget, vmem_limit_bytes)."""
    MiB = 1024 * 1024
    cap = None
    try:
        cap = getattr(pltpu.get_tpu_info(), "vmem_capacity_bytes", None)
    except Exception:
        cap = None
    if cap is None or cap <= 64 * MiB:
        # v7x-class (64 MiB physical VMEM) or unknown: stay conservative.
        return 20 * MiB, 44 * MiB
    # v5e / v6e: 128 MiB physical VMEM -> bigger tiles, fewer grid steps.
    return 48 * MiB, 80 * MiB


def _pick_row_tile(H, W, Cin, Cout, fuse_taps, budget_bytes, itemsize=4):
    """Largest divisor of H whose tile fits the budget with lane-aligned output."""
    def tile_bytes(th):
        pw = th * W
        body = 2 * Cin * pw * itemsize                 # double-buffered input
        halos = 2 * 2 * Cin * W * itemsize             # double-buffered halo rows
        weights = (Cout * 9 * Cin + Cout) * itemsize
        outb = 2 * Cout * pw * itemsize                # double-buffered output
        strip = Cin * ((th + 2) * W + 2) * itemsize
        col = 9 * Cin * pw * itemsize if fuse_taps else 0
        return body + halos + weights + outb + strip + col

    for th in range(H, 0, -1):
        if H % th:
            continue
        if th != H and (th * W) % 128 != 0:
            continue
        if tile_bytes(th) <= budget_bytes:
            return th
    # TODO(synk): add W / Cout tiling axes instead of failing for huge shapes.
    raise ValueError(
        f"Sym_CNN2d pallas kernel: no row tile of H={H} fits the VMEM budget "
        f"({budget_bytes} bytes); W/Cout tiling is required for this shape.")


def sym_cnn2d_forward(x_nchw, ini_kernel, ini_bias, *, row_tile=None,
                      fuse_taps=None, use_bf16=False):
    """Forward pass of Sym_CNN2d.

    x_nchw:     (N, Cin, H, W)     float32
    ini_kernel: (Cout, Cin, 3, 3)  float32
    ini_bias:   (1, Cout, 1, 1)    float32
    returns:    (N, Cout, H, W)    float32
    """
    # mani_kernel = (kernel.permute(0,1,3,2) + kernel) / 2   (symmetrize 3x3 taps)
    mani_kernel = (jnp.transpose(ini_kernel, (0, 1, 3, 2)) + ini_kernel) * 0.5
    Cout, Cin, KH, KW = ini_kernel.shape
    assert KH == 3 and KW == 3, "Sym_CNN2d hard-codes kernel_size=3"
    N, Cin_x, H, W = x_nchw.shape
    assert Cin_x == Cin

    if fuse_taps is None:
        fuse_taps = Cin < 64          # large Cin: accumulate 9 matmuls, no slab
    compute_dtype = jnp.bfloat16 if use_bf16 else x_nchw.dtype

    budget, vmem_limit = _vmem_budget_and_limit()
    TH = row_tile if row_tile is not None else _pick_row_tile(
        H, W, Cin, Cout, fuse_taps, budget)
    if H % TH != 0:
        raise ValueError("row tile must divide H")
    if TH != H and (TH * W) % 128 != 0:
        raise ValueError("row tile must give lane-aligned (TH*W % 128 == 0) blocks")
    HB = H // TH

    # Weights: (Cout, Cin, 3, 3) -> (Cout, 3, 3, Cin) -> (Cout, 9*Cin);
    # columns ordered (dy, dx, cin) to match the im2col row packing.
    w_fused = jnp.transpose(mani_kernel, (0, 2, 3, 1)).reshape(
        Cout, 9 * Cin).astype(compute_dtype)
    b_col = ini_bias.reshape(Cout, 1).astype(jnp.float32)

    # Free metadata reshape: NCHW -> (N, Cin, H*W).  No transpose, no padding,
    # no windowed copy -- the kernel reads the input exactly once.
    x_flat = x_nchw.reshape(N, Cin, H * W)

    # Tiny halo side-arrays: one row above / below each row tile (clamped at the
    # image borders; the kernel zeroes those under pl.when).
    row_start = jnp.arange(HB) * TH
    top_rows = jnp.maximum(row_start - 1, 0)
    bot_rows = jnp.minimum(row_start + TH, H - 1)
    x_top = jnp.transpose(x_nchw[:, :, top_rows, :], (0, 2, 1, 3))  # (N,HB,Cin,W)
    x_bot = jnp.transpose(x_nchw[:, :, bot_rows, :], (0, 2, 1, 3))  # (N,HB,Cin,W)

    kernel = _make_kernel(W=W, TH=TH, Cin=Cin, Cout=Cout, fuse_taps=fuse_taps)

    scratch = [pltpu.VMEM((Cin, (TH + 2) * W + 2), compute_dtype)]
    if fuse_taps:
        scratch.append(pltpu.VMEM((9 * Cin, TH * W), compute_dtype))

    flops = 2 * N * H * W * (9 * Cin) * Cout
    bytes_accessed = (4 * (x_flat.size + x_top.size + x_bot.size
                           + N * Cout * H * W + b_col.size)
                      + w_fused.size * w_fused.dtype.itemsize)
    cost = pl.CostEstimate(flops=flops, transcendentals=0,
                           bytes_accessed=int(bytes_accessed))

    out_flat = pl.pallas_call(
        kernel,
        out_shape=jax.ShapeDtypeStruct((N, Cout, H * W), x_nchw.dtype),
        grid_spec=pltpu.PrefetchScalarGridSpec(
            num_scalar_prefetch=0,
            grid=(N, HB),
            in_specs=[
                pl.BlockSpec((None, Cin, TH * W), lambda n, j: (n, 0, j)),
                pl.BlockSpec((None, None, Cin, W), lambda n, j: (n, j, 0, 0)),
                pl.BlockSpec((None, None, Cin, W), lambda n, j: (n, j, 0, 0)),
                pl.BlockSpec((Cout, 9 * Cin), lambda n, j: (0, 0)),
                pl.BlockSpec((Cout, 1), lambda n, j: (0, 0)),
            ],
            out_specs=pl.BlockSpec((None, Cout, TH * W), lambda n, j: (n, 0, j)),
            scratch_shapes=scratch,
        ),
        compiler_params=pltpu.CompilerParams(
            dimension_semantics=("parallel", "parallel"),
            vmem_limit_bytes=vmem_limit,
        ),
        cost_estimate=cost,
    )(x_flat, x_top, x_bot, w_fused, b_col)

    # (N, Cout, H*W) is already flattened NCHW: pure metadata reshape.
    return out_flat.reshape(N, Cout, H, W)


def _reference_forward(x_nchw, ini_kernel, ini_bias):
    """Pure-JAX reference (mirrors F.conv2d with padding=1 + bias + ReLU)."""
    mani_kernel = (jnp.transpose(ini_kernel, (0, 1, 3, 2)) + ini_kernel) * 0.5
    out = jax.lax.conv_general_dilated(
        x_nchw, mani_kernel, window_strides=(1, 1), padding=((1, 1), (1, 1)),
        dimension_numbers=("NCHW", "OIHW", "NCHW"))
    out = out + ini_bias
    return jnp.maximum(out, 0.0)


if __name__ == "__main__":
    N, Cin, Cout, H, W, K = 2, 4, 8, 16, 16, 3

    key = jax.random.PRNGKey(0)
    k_x, k_w = jax.random.split(key)

    x = jax.random.normal(k_x, (N, Cin, H, W), dtype=jnp.float32)
    # kaiming_normal_(mode='fan_out', nonlinearity='relu'): std = sqrt(2/fan_out)
    std = (2.0 / (Cout * K * K)) ** 0.5
    ini_kernel = std * jax.random.normal(k_w, (Cout, Cin, K, K), dtype=jnp.float32)
    ini_bias = jnp.full((1, Cout, 1, 1), 0.01, dtype=jnp.float32)

    ref = _reference_forward(x, ini_kernel, ini_bias)

    fwd = jax.jit(sym_cnn2d_forward,
                  static_argnames=("row_tile", "fuse_taps", "use_bf16"))

    # 1) auto-picked tile (TH = H -> grid (N, 1)), fused K=9*Cin matmul path.
    out = jax.block_until_ready(fwd(x, ini_kernel, ini_bias))
    assert out.shape == (N, Cout, H, W)
    assert jnp.allclose(out, ref, atol=1e-4, rtol=1e-4), "auto-tile mismatch"

    # 2) row-tiled path (TH=8 -> grid (2, 2)) exercising the interior halo rows.
    out_tiled = jax.block_until_ready(fwd(x, ini_kernel, ini_bias, row_tile=8))
    assert jnp.allclose(out_tiled, ref, atol=1e-4, rtol=1e-4), "tiled mismatch"

    # 3) large-Cin style path: 9 accumulated matmuls, no im2col slab.
    out_acc = jax.block_until_ready(
        fwd(x, ini_kernel, ini_bias, row_tile=8, fuse_taps=False))
    assert jnp.allclose(out_acc, ref, atol=1e-4, rtol=1e-4), "acc-path mismatch"

    print("KERNEL_OK")
</pallas_src>

<mosaic_0001>
module attributes {stable_mosaic.version = 11 : i64} {
  func.func @kernel(%arg0: i32, %arg1: i32, %arg2: memref<1x4x256xf32, #tpu.memory_space<vmem>>, %arg3: memref<1x1x4x16xf32, #tpu.memory_space<vmem>>, %arg4: memref<1x1x4x16xf32, #tpu.memory_space<vmem>>, %arg5: memref<8x36xf32, #tpu.memory_space<vmem>>, %arg6: memref<8x1xf32, #tpu.memory_space<vmem>>, %arg7: memref<1x8x256xf32, #tpu.memory_space<vmem>>, %arg8: memref<4x290xf32, #tpu.memory_space<vmem>>, %arg9: memref<36x256xf32, #tpu.memory_space<vmem>>) attributes {dimension_semantics = [#tpu.dimension_semantics<parallel>, #tpu.dimension_semantics<parallel>], iteration_bounds = array<i64: 2, 1>, scalar_prefetch = 0 : i64, scratch_operands = 2 : i64, tpu.core_type = #tpu.core_type<tc>, window_params = [{transform_indices = @transform_0, window_bounds = array<i64: 1, 4, 256>}, {transform_indices = @transform_1, window_bounds = array<i64: 1, 1, 4, 16>}, {transform_indices = @transform_2, window_bounds = array<i64: 1, 1, 4, 16>}, {pipeline_mode = #tpu.pipeline_mode<synchronous>, transform_indices = @transform_3, window_bounds = array<i64: 8, 36>}, {pipeline_mode = #tpu.pipeline_mode<synchronous>, transform_indices = @transform_4, window_bounds = array<i64: 8, 1>}, {transform_indices = @transform_5, window_bounds = array<i64: 1, 8, 256>}]} {
    %cst = arith.constant 0.000000e+00 : f32
    %0 = vector.broadcast %cst : f32 to vector<4x290xf32>
    %c0 = arith.constant 0 : index
    %c0_0 = arith.constant 0 : index
    %1 = vector.load %arg8[%c0, %c0_0] : memref<4x290xf32, #tpu.memory_space<vmem>>, vector<4x290xf32>
    tpu.vector_store %arg8[%c0, %c0_0], %0 {strides = array<i32>} : memref<4x290xf32, #tpu.memory_space<vmem>>, vector<4x290xf32>,
    %c0_1 = arith.constant 0 : index
    %c0_2 = arith.constant 0 : index
    %c0_3 = arith.constant 0 : index
    %2 = vector.load %arg2[%c0_1, %c0_2, %c0_3] : memref<1x4x256xf32, #tpu.memory_space<vmem>>, vector<1x4x256xf32>
    %3 = vector.shape_cast %2 : vector<1x4x256xf32> to vector<4x256xf32>
    %c0_4 = arith.constant 0 : index
    %c17 = arith.constant 17 : index
    %4 = vector.load %arg8[%c0_4, %c17] : memref<4x290xf32, #tpu.memory_space<vmem>>, vector<4x256xf32>
    tpu.vector_store %arg8[%c0_4, %c17], %3 {strides = array<i32>} : memref<4x290xf32, #tpu.memory_space<vmem>>, vector<4x256xf32>,
    %c0_i32 = arith.constant 0 : i32
    %5 = arith.cmpi sgt, %arg1, %c0_i32 : i32
    %6 = arith.extui %5 : i1 to i32
    %c0_i32_5 = arith.constant 0 : i32
    %7 = arith.cmpi ne, %6, %c0_i32_5 : i32
    scf.if %7 {
      %c0_50 = arith.constant 0 : index
      %c0_51 = arith.constant 0 : index
      %c0_52 = arith.constant 0 : index
      %c0_53 = arith.constant 0 : index
      %71 = vector.load %arg3[%c0_50, %c0_51, %c0_52, %c0_53] : memref<1x1x4x16xf32, #tpu.memory_space<vmem>>, vector<1x1x4x16xf32>
      %72 = vector.shape_cast %71 : vector<1x1x4x16xf32> to vector<4x16xf32>
      %c0_54 = arith.constant 0 : index
      %c1_55 = arith.constant 1 : index
      %73 = vector.load %arg8[%c0_54, %c1_55] : memref<4x290xf32, #tpu.memory_space<vmem>>, vector<4x16xf32>
      tpu.vector_store %arg8[%c0_54, %c1_55], %72 {strides = array<i32>} : memref<4x290xf32, #tpu.memory_space<vmem>>, vector<4x16xf32>,
    } else {
    }
    %c0_i32_6 = arith.constant 0 : i32
    %8 = arith.cmpi slt, %arg1, %c0_i32_6 : i32
    %9 = arith.extui %8 : i1 to i32
    %c0_i32_7 = arith.constant 0 : i32
    %10 = arith.cmpi ne, %9, %c0_i32_7 : i32
    scf.if %10 {
      %c0_50 = arith.constant 0 : index
      %c0_51 = arith.constant 0 : index
      %c0_52 = arith.constant 0 : index
      %c0_53 = arith.constant 0 : index
      %71 = vector.load %arg4[%c0_50, %c0_51, %c0_52, %c0_53] : memref<1x1x4x16xf32, #tpu.memory_space<vmem>>, vector<1x1x4x16xf32>
      %72 = vector.shape_cast %71 : vector<1x1x4x16xf32> to vector<4x16xf32>
      %c0_54 = arith.constant 0 : index
      %c273 = arith.constant 273 : index
      %73 = vector.load %arg8[%c0_54, %c273] : memref<4x290xf32, #tpu.memory_space<vmem>>, vector<4x16xf32>
      tpu.vector_store %arg8[%c0_54, %c273], %72 {strides = array<i32>} : memref<4x290xf32, #tpu.memory_space<vmem>>, vector<4x16xf32>,
    } else {
    }
    %11 = tpu.iota {dimensions = array<i32: 1>} : vector<1x256xi32>
    %c15_i32 = arith.constant 15 : i32
    %12 = vector.broadcast %c15_i32 : i32 to vector<1x256xi32>
    %13 = arith.andi %11, %12 : vector<1x256xi32>
    %c0_i32_8 = arith.constant 0 : i32
    %14 = vector.broadcast %c0_i32_8 : i32 to vector<1x256xi32>
    %15 = arith.cmpi ne, %13, %14 : vector<1x256xi32>
    %c15_i32_9 = arith.constant 15 : i32
    %16 = vector.broadcast %c15_i32_9 : i32 to vector<1x256xi32>
    %17 = arith.cmpi ne, %13, %16 : vector<1x256xi32>
    %c0_10 = arith.constant 0 : index
    %c0_11 = arith.constant 0 : index
    %18 = vector.load %arg8[%c0_10, %c0_11] : memref<4x290xf32, #tpu.memory_space<vmem>>, vector<4x256xf32>
    %cst_12 = arith.constant 0.000000e+00 : f32
    %19 = vector.shape_cast %15 : vector<1x256xi1> to vector<1x256xi1>
    %20 = vector.broadcast %19 : vector<1x256xi1> to vector<4x256xi1>
    %21 = vector.broadcast %cst_12 : f32 to vector<4x256xf32>
    %22 = arith.select %20, %18, %21 : vector<4x256xi1>, vector<4x256xf32>
    %c0_13 = arith.constant 0 : index
    %c0_14 = arith.constant 0 : index
    %23 = vector.load %arg9[%c0_13, %c0_14] : memref<36x256xf32, #tpu.memory_space<vmem>>, vector<4x256xf32>
    tpu.vector_store %arg9[%c0_13, %c0_14], %22 {strides = array<i32>} : memref<36x256xf32, #tpu.memory_space<vmem>>, vector<4x256xf32>,
    %c0_15 = arith.constant 0 : index
    %c1 = arith.constant 1 : index
    %24 = vector.load %arg8[%c0_15, %c1] : memref<4x290xf32, #tpu.memory_space<vmem>>, vector<4x256xf32>
    %c4 = arith.constant 4 : index
    %c0_16 = arith.constant 0 : index
    %25 = vector.load %arg9[%c4, %c0_16] : memref<36x256xf32, #tpu.memory_space<vmem>>, vector<4x256xf32>
    tpu.vector_store %arg9[%c4, %c0_16], %24 {strides = array<i32>} : memref<36x256xf32, #tpu.memory_space<vmem>>, vector<4x256xf32>,
    %c0_17 = arith.constant 0 : index
    %c2 = arith.constant 2 : index
    %26 = vector.load %arg8[%c0_17, %c2] : memref<4x290xf32, #tpu.memory_space<vmem>>, vector<4x256xf32>
    %cst_18 = arith.constant 0.000000e+00 : f32
    %27 = vector.shape_cast %17 : vector<1x256xi1> to vector<1x256xi1>
    %28 = vector.broadcast %27 : vector<1x256xi1> to vector<4x256xi1>
    %29 = vector.broadcast %cst_18 : f32 to vector<4x256xf32>
    %30 = arith.select %28, %26, %29 : vector<4x256xi1>, vector<4x256xf32>
    %c8 = arith.constant 8 : index
    %c0_19 = arith.constant 0 : index
    %31 = vector.load %arg9[%c8, %c0_19] : memref<36x256xf32, #tpu.memory_space<vmem>>, vector<4x256xf32>
    tpu.vector_store %arg9[%c8, %c0_19], %30 {strides = array<i32>} : memref<36x256xf32, #tpu.memory_space<vmem>>, vector<4x256xf32>,
    %c0_20 = arith.constant 0 : index
    %c16 = arith.constant 16 : index
    %32 = vector.load %arg8[%c0_20, %c16] : memref<4x290xf32, #tpu.memory_space<vmem>>, vector<4x256xf32>
    %cst_21 = arith.constant 0.000000e+00 : f32
    %33 = vector.shape_cast %15 : vector<1x256xi1> to vector<1x256xi1>
    %34 = vector.broadcast %33 : vector<1x256xi1> to vector<4x256xi1>
    %35 = vector.broadcast %cst_21 : f32 to vector<4x256xf32>
    %36 = arith.select %34, %32, %35 : vector<4x256xi1>, vector<4x256xf32>
    %c12 = arith.constant 12 : index
    %c0_22 = arith.constant 0 : index
    %37 = vector.load %arg9[%c12, %c0_22] : memref<36x256xf32, #tpu.memory_space<vmem>>, vector<4x256xf32>
    tpu.vector_store %arg9[%c12, %c0_22], %36 {strides = array<i32>} : memref<36x256xf32, #tpu.memory_space<vmem>>, vector<4x256xf32>,
    %c0_23 = arith.constant 0 : index
    %c17_24 = arith.constant 17 : index
    %38 = vector.load %arg8[%c0_23, %c17_24] : memref<4x290xf32, #tpu.memory_space<vmem>>, vector<4x256xf32>
    %c16_25 = arith.constant 16 : index
    %c0_26 = arith.constant 0 : index
    %39 = vector.load %arg9[%c16_25, %c0_26] : memref<36x256xf32, #tpu.memory_space<vmem>>, vector<4x256xf32>
    tpu.vector_store %arg9[%c16_25, %c0_26], %38 {strides = array<i32>} : memref<36x256xf32, #tpu.memory_space<vmem>>, vector<4x256xf32>,
    %c0_27 = arith.constant 0 : index
    %c18 = arith.constant 18 : index
    %40 = vector.load %arg8[%c0_27, %c18] : memref<4x290xf32, #tpu.memory_space<vmem>>, vector<4x256xf32>
    %cst_28 = arith.constant 0.000000e+00 : f32
    %41 = vector.shape_cast %17 : vector<1x256xi1> to vector<1x256xi1>
    %42 = vector.broadcast %41 : vector<1x256xi1> to vector<4x256xi1>
    %43 = vector.broadcast %cst_28 : f32 to vector<4x256xf32>
    %44 = arith.select %42, %40, %43 : vector<4x256xi1>, vector<4x256xf32>
    %c20 = arith.constant 20 : index
    %c0_29 = arith.constant 0 : index
    %45 = vector.load %arg9[%c20, %c0_29] : memref<36x256xf32, #tpu.memory_space<vmem>>, vector<4x256xf32>
    tpu.vector_store %arg9[%c20, %c0_29], %44 {strides = array<i32>} : memref<36x256xf32, #tpu.memory_space<vmem>>, vector<4x256xf32>,
    %c0_30 = arith.constant 0 : index
    %c32 = arith.constant 32 : index
    %46 = vector.load %arg8[%c0_30, %c32] : memref<4x290xf32, #tpu.memory_space<vmem>>, vector<4x256xf32>
    %cst_31 = arith.constant 0.000000e+00 : f32
    %47 = vector.shape_cast %15 : vector<1x256xi1> to vector<1x256xi1>
    %48 = vector.broadcast %47 : vector<1x256xi1> to vector<4x256xi1>
    %49 = vector.broadcast %cst_31 : f32 to vector<4x256xf32>
    %50 = arith.select %48, %46, %49 : vector<4x256xi1>, vector<4x256xf32>
    %c24 = arith.constant 24 : index
    %c0_32 = arith.constant 0 : index
    %51 = vector.load %arg9[%c24, %c0_32] : memref<36x256xf32, #tpu.memory_space<vmem>>, vector<4x256xf32>
    tpu.vector_store %arg9[%c24, %c0_32], %50 {strides = array<i32>} : memref<36x256xf32, #tpu.memory_space<vmem>>, vector<4x256xf32>,
    %c0_33 = arith.constant 0 : index
    %c33 = arith.constant 33 : index
    %52 = vector.load %arg8[%c0_33, %c33] : memref<4x290xf32, #tpu.memory_space<vmem>>, vector<4x256xf32>
    %c28 = arith.constant 28 : index
    %c0_34 = arith.constant 0 : index
    %53 = vector.load %arg9[%c28, %c0_34] : memref<36x256xf32, #tpu.memory_space<vmem>>, vector<4x256xf32>
    tpu.vector_store %arg9[%c28, %c0_34], %52 {strides = array<i32>} : memref<36x256xf32, #tpu.memory_space<vmem>>, vector<4x256xf32>,
    %c0_35 = arith.constant 0 : index
    %c34 = arith.constant 34 : index
    %54 = vector.load %arg8[%c0_35, %c34] : memref<4x290xf32, #tpu.memory_space<vmem>>, vector<4x256xf32>
    %cst_36 = arith.constant 0.000000e+00 : f32
    %55 = vector.shape_cast %17 : vector<1x256xi1> to vector<1x256xi1>
    %56 = vector.broadcast %55 : vector<1x256xi1> to vector<4x256xi1>
    %57 = vector.broadcast %cst_36 : f32 to vector<4x256xf32>
    %58 = arith.select %56, %54, %57 : vector<4x256xi1>, vector<4x256xf32>
    %c32_37 = arith.constant 32 : index
    %c0_38 = arith.constant 0 : index
    %59 = vector.load %arg9[%c32_37, %c0_38] : memref<36x256xf32, #tpu.memory_space<vmem>>, vector<4x256xf32>
    tpu.vector_store %arg9[%c32_37, %c0_38], %58 {strides = array<i32>} : memref<36x256xf32, #tpu.memory_space<vmem>>, vector<4x256xf32>,
    %c0_39 = arith.constant 0 : index
    %c0_40 = arith.constant 0 : index
    %60 = vector.load %arg5[%c0_39, %c0_40] : memref<8x36xf32, #tpu.memory_space<vmem>>, vector<8x36xf32>
    %c0_41 = arith.constant 0 : index
    %c0_42 = arith.constant 0 : index
    %61 = vector.load %arg9[%c0_41, %c0_42] : memref<36x256xf32, #tpu.memory_space<vmem>>, vector<36x256xf32>
    %cst_43 = arith.constant dense<0.000000e+00> : vector<8x256xf32>
    %62 = tpu.matmul %60, %61, %cst_43 {dimension_numbers = #tpu.dot_dimension_numbers<[1], [0], [0], [1], [0, 0, 1, 1], [], []>} : vector<8x36xf32>, vector<36x256xf32>, vector<8x256xf32> -> vector<8x256xf32>
    %c0_44 = arith.constant 0 : index
    %c0_45 = arith.constant 0 : index
    %63 = vector.load %arg6[%c0_44, %c0_45] : memref<8x1xf32, #tpu.memory_space<vmem>>, vector<8x1xf32>
    %64 = vector.broadcast %63 : vector<8x1xf32> to vector<8x256xf32>
    %65 = arith.addf %62, %64 : vector<8x256xf32>
    %cst_46 = arith.constant 0.000000e+00 : f32
    %66 = vector.broadcast %cst_46 : f32 to vector<8x256xf32>
    %67 = arith.maximumf %65, %66 : vector<8x256xf32>
    %c0_47 = arith.constant 0 : index
    %c0_48 = arith.constant 0 : index
    %c0_49 = arith.constant 0 : index
    %68 = vector.load %arg7[%c0_47, %c0_48, %c0_49] : memref<1x8x256xf32, #tpu.memory_space<vmem>>, vector<1x8x256xf32>
    %69 = vector.shape_cast %68 : vector<1x8x256xf32> to vector<8x256xf32>
    %70 = vector.shape_cast %67 : vector<8x256xf32> to vector<1x8x256xf32>
    tpu.vector_store %arg7[%c0_47, %c0_48, %c0_49], %70 {strides = array<i32>} : memref<1x8x256xf32, #tpu.memory_space<vmem>>, vector<1x8x256xf32>,
    return
  }
  func.func @transform_0(%arg0: i32, %arg1: i32) -> (i32, i32, i32) {
    %c0_i32 = arith.constant 0 : i32
    %c0_i32_0 = arith.constant 0 : i32
    return %arg0, %c0_i32, %arg1 : i32, i32, i32
  }
  func.func @transform_1(%arg0: i32, %arg1: i32) -> (i32, i32, i32, i32) {
    %c0_i32 = arith.constant 0 : i32
    %c0_i32_0 = arith.constant 0 : i32
    %c0_i32_1 = arith.constant 0 : i32
    return %arg0, %arg1, %c0_i32, %c0_i32_0 : i32, i32, i32, i32
  }
  func.func @transform_2(%arg0: i32, %arg1: i32) -> (i32, i32, i32, i32) {
    %c0_i32 = arith.constant 0 : i32
    %c0_i32_0 = arith.constant 0 : i32
    %c0_i32_1 = arith.constant 0 : i32
    return %arg0, %arg1, %c0_i32, %c0_i32_0 : i32, i32, i32, i32
  }
  func.func @transform_3(%arg0: i32, %arg1: i32) -> (i32, i32) {
    %c0_i32 = arith.constant 0 : i32
    %c0_i32_0 = arith.constant 0 : i32
    %c0_i32_1 = arith.constant 0 : i32
    return %c0_i32, %c0_i32_0 : i32, i32
  }
  func.func @transform_4(%arg0: i32, %arg1: i32) -> (i32, i32) {
    %c0_i32 = arith.constant 0 : i32
    %c0_i32_0 = arith.constant 0 : i32
    %c0_i32_1 = arith.constant 0 : i32
    return %c0_i32, %c0_i32_0 : i32, i32
  }
  func.func @transform_5(%arg0: i32, %arg1: i32) -> (i32, i32, i32) {
    %c0_i32 = arith.constant 0 : i32
    %c0_i32_0 = arith.constant 0 : i32
    return %arg0, %c0_i32, %arg1 : i32, i32, i32
  }
}

</mosaic_0001>

<llo_original>
// kernel: sym_cnn2d_forward.1
$region0: #{sym_cnn2d_forward.1}
  #allocation0 [shape = 'u32[]', space=smem, size = 0x4, offset = 0x4, fixed_abs, tag = 'smem constant byte address 0x4 - core index']
  #allocation1 [shape = 'u32[144,128]{1,0:T(1,128)}', space=vmem, size = 0x12000, scoped, tag = 'internal scratch']
  #allocation2 [shape = 'f32[4,290]{1,0:T(4,128)}', space=vmem, size = 0x1800, scoped, tag = 'scratch operand']
  #allocation3 [shape = 'f32[36,256]{1,0:T(8,128)}', space=vmem, size = 0xa000, scoped, tag = 'scratch operand']
  %s0 = inlined_call_operand.vmem [shape: f32[2,4,256], index: 0, kind: input, shape index: {}]
  %s1 = inlined_call_operand.vmem [shape: f32[2,1,4,16], index: 1, kind: input, shape index: {}]
  %s2 = inlined_call_operand.vmem [shape: f32[2,1,4,16], index: 2, kind: input, shape index: {}]
  %s3 = inlined_call_operand.vmem [shape: f32[8,36], index: 3, kind: input, shape index: {}]
  %s4 = inlined_call_operand.vmem [shape: f32[8,1], index: 4, kind: input, shape index: {}]
  %s5 = inlined_call_operand.vmem [shape: f32[2,8,256], index: 5, kind: output, shape index: {}]
  %s6 = sld [smem:[#allocation0]]
  $region61: #{sym_cnn2d_forward.1} parent=0
    _
  %s8 = ssub.s32 1, %s6
  %s9 = scalar_select 0, %s8, %s6
  loop: start=0, step=1, limit=4
  $region2: #{sym_cnn2d_forward.1} parent=0 // loop_pre_header
    _
  $region3: #{sym_cnn2d_forward.1} parent=0 // loop_header
    %s11 = sphi 0, %s15
    %p12 = scmp.ge.s32.totalorder %s11, 4
    %s18 = sphi 0, %s30
    %s19 = sphi 0, %s26
    %s20 = sphi 0, %s18
    %s21 = sphi 0, %s19
    %s22 = sphi 0, %s20
    %s23 = sphi 0, %s21
    %s35 = sphi 0, %s37
    %s38 = sphi 0, %s35
    %s39 = sphi 0, %s38
    %s55 = sphi 0, %s39
    %s63 = sphi 0, %s65
    %s66 = sphi 0, %s63
    %s67 = sphi 0, %s66
    %s83 = sphi 0, %s67
    %s91 = sphi 0, %s93
    %s94 = sphi 0, %s91
    %s95 = sphi 0, %s94
    %s111 = sphi 0, %s95
    %s115 = sphi 0, %s115
    %s117 = sphi 0, %s115
    %s118 = sphi 0, %s117
    %s132 = sphi 0, %s118
    %s136 = sphi 0, %s136
    %s138 = sphi 0, %s136
    %s139 = sphi 0, %s138
    %s153 = sphi 0, %s139
    %s161 = sphi 0, %s163
    %s164 = sphi 0, %s161
    %s165 = sphi 0, %s164
    %s181 = sphi 0, %s165
  $region4: #{sym_cnn2d_forward.1} parent=0 // loop_header_branch
    %14 = sbr.rel (%p12) target = $region8
  $region5: #{sym_cnn2d_forward.1} parent=0 // loop_body
    %s16 = ssub.s32 %s11, 1
    %s17 = ssub.s32 %s11, 2
    %s24 = sadd.s32 1, %s19
    %p25 = scmp.ge.s32.totalorder %s24, 1
    %s26 = scalar_select %p25, 0, %s24
    %s27 = sadd.s32 1, %s18
    %s28 = scalar_select %p25, %s27, %s18
    %p29 = scmp.ge.s32.totalorder %s28, 2
    %s30 = scalar_select %p29, 0, %s28
    %s31 = ssub.s32 %s18, %s30
    %s32 = ssub.s32 %s19, %s26
    %s33 = sor.u32 %s31, %s32
    %p34 = scmp.eq.s32.totalorder %s33, 0
    %s36 = sadd.s32 %s35, 1
    %s37 = scalar_select %p34, %s35, %s36
    %p40 = pneg %p34
    %p41 = scmp.eq.s32.totalorder %s11, 1
    %p42 = por %p40, %p41
    %p43 = scmp.ne.s32.totalorder %s35, %s38
    %p44 = scmp.eq.s32.totalorder %s11, 0
    %p45 = por %p43, %p44
    %p46 = scmp.ne.s32.totalorder %s35, %s38
    %p47 = scmp.eq.s32.totalorder %s16, 1
    %p48 = por %p46, %p47
    %p49 = scmp.ne.s32.totalorder %s38, %s39
    %p50 = scmp.eq.s32.totalorder %s16, 0
    %p51 = por %p49, %p50
    %p52 = scmp.ne.s32.totalorder %s38, %s39
    %p53 = scmp.eq.s32.totalorder %s17, 1
    %p54 = por %p52, %p53
    %p56 = scmp.ne.s32.totalorder %s39, %s55
    %p57 = scmp.eq.s32.totalorder %s17, 0
    %p58 = por %p56, %p57
    %s59 = ssub.s32 %s18, %s30
    %s60 = ssub.s32 %s19, %s26
    %s61 = sor.u32 %s59, %s60
    %p62 = scmp.eq.s32.totalorder %s61, 0
    %s64 = sadd.s32 %s63, 1
    %s65 = scalar_select %p62, %s63, %s64
    %p68 = pneg %p62
    %p69 = scmp.eq.s32.totalorder %s11, 1
    %p70 = por %p68, %p69
    %p71 = scmp.ne.s32.totalorder %s63, %s66
    %p72 = scmp.eq.s32.totalorder %s11, 0
    %p73 = por %p71, %p72
    %p74 = scmp.ne.s32.totalorder %s63, %s66
    %p75 = scmp.eq.s32.totalorder %s16, 1
    %p76 = por %p74, %p75
    %p77 = scmp.ne.s32.totalorder %s66, %s67
    %p78 = scmp.eq.s32.totalorder %s16, 0
    %p79 = por %p77, %p78
    %p80 = scmp.ne.s32.totalorder %s66, %s67
    %p81 = scmp.eq.s32.totalorder %s17, 1
    %p82 = por %p80, %p81
    %p84 = scmp.ne.s32.totalorder %s67, %s83
    %p85 = scmp.eq.s32.totalorder %s17, 0
    %p86 = por %p84, %p85
    %s87 = ssub.s32 %s18, %s30
    %s88 = ssub.s32 %s19, %s26
    %s89 = sor.u32 %s87, %s88
    %p90 = scmp.eq.s32.totalorder %s89, 0
    %s92 = sadd.s32 %s91, 1
    %s93 = scalar_select %p90, %s91, %s92
    %p96 = pneg %p90
    %p97 = scmp.eq.s32.totalorder %s11, 1
    %p98 = por %p96, %p97
    %p99 = scmp.ne.s32.totalorder %s91, %s94
    %p100 = scmp.eq.s32.totalorder %s11, 0
    %p101 = por %p99, %p100
    %p102 = scmp.ne.s32.totalorder %s91, %s94
    %p103 = scmp.eq.s32.totalorder %s16, 1
    %p104 = por %p102, %p103
    %p105 = scmp.ne.s32.totalorder %s94, %s95
    %p106 = scmp.eq.s32.totalorder %s16, 0
    %p107 = por %p105, %p106
    %p108 = scmp.ne.s32.totalorder %s94, %s95
    %p109 = scmp.eq.s32.totalorder %s17, 1
    %p110 = por %p108, %p109
    %p112 = scmp.ne.s32.totalorder %s95, %s111
    %p113 = scmp.eq.s32.totalorder %s17, 0
    %p114 = por %p112, %p113
    %s116 = sadd.s32 %s115, 1
    %p119 = scmp.eq.s32.totalorder %s11, 1
    %p120 = scmp.ne.s32.totalorder %s115, %s117
    %p121 = scmp.eq.s32.totalorder %s11, 0
    %p122 = por %p120, %p121
    %p123 = scmp.ne.s32.totalorder %s115, %s117
    %p124 = scmp.eq.s32.totalorder %s16, 1
    %p125 = por %p123, %p124
    %p126 = scmp.ne.s32.totalorder %s117, %s118
    %p127 = scmp.eq.s32.totalorder %s16, 0
    %p128 = por %p126, %p127
    %p129 = scmp.ne.s32.totalorder %s117, %s118
    %p130 = scmp.eq.s32.totalorder %s17, 1
    %p131 = por %p129, %p130
    %p133 = scmp.ne.s32.totalorder %s118, %s132
    %p134 = scmp.eq.s32.totalorder %s17, 0
    %p135 = por %p133, %p134
    %s137 = sadd.s32 %s136, 1
    %p140 = scmp.eq.s32.totalorder %s11, 1
    %p141 = scmp.ne.s32.totalorder %s136, %s138
    %p142 = scmp.eq.s32.totalorder %s11, 0
    %p143 = por %p141, %p142
    %p144 = scmp.ne.s32.totalorder %s136, %s138
    %p145 = scmp.eq.s32.totalorder %s16, 1
    %p146 = por %p144, %p145
    %p147 = scmp.ne.s32.totalorder %s138, %s139
    %p148 = scmp.eq.s32.totalorder %s16, 0
    %p149 = por %p147, %p148
    %p150 = scmp.ne.s32.totalorder %s138, %s139
    %p151 = scmp.eq.s32.totalorder %s17, 1
    %p152 = por %p150, %p151
    %p154 = scmp.ne.s32.totalorder %s139, %s153
    %p155 = scmp.eq.s32.totalorder %s17, 0
    %p156 = por %p154, %p155
    %s157 = ssub.s32 %s18, %s30
    %s158 = ssub.s32 %s19, %s26
    %s159 = sor.u32 %s157, %s158
    %p160 = scmp.eq.s32.totalorder %s159, 0
    %s162 = sadd.s32 %s161, 1
    %s163 = scalar_select %p160, %s161, %s162
    %p166 = pneg %p160
    %p167 = scmp.eq.s32.totalorder %s11, 1
    %p168 = por %p166, %p167
    %p169 = scmp.ne.s32.totalorder %s161, %s164
    %p170 = scmp.eq.s32.totalorder %s11, 0
    %p171 = por %p169, %p170
    %p172 = scmp.ne.s32.totalorder %s161, %s164
    %p173 = scmp.eq.s32.totalorder %s16, 1
    %p174 = por %p172, %p173
    %p175 = scmp.ne.s32.totalorder %s164, %s165
    %p176 = scmp.eq.s32.totalorder %s16, 0
    %p177 = por %p175, %p176
    %p178 = scmp.ne.s32.totalorder %s164, %s165
    %p179 = scmp.eq.s32.totalorder %s17, 1
    %p180 = por %p178, %p179
    %p182 = scmp.ne.s32.totalorder %s165, %s181
    %p183 = scmp.eq.s32.totalorder %s17, 0
    %p184 = por %p182, %p183
    %p185 = scmp.le.s32.totalorder 1, %s11
    %p186 = scmp.lt.s32.totalorder %s11, 3
    %p187 = pnand %p185, %p186
    %p188 = pneg %p187
    // Predicated region
    $region9: #{sym_cnn2d_forward.1} parent=5 // pred_check
      _
    $region10: #{sym_cnn2d_forward.1} parent=5 // pred_check_branch
      %190 = sbr.rel (%p187) target = $region12
    $region11: #{sym_cnn2d_forward.1} parent=5 // pred_region
      %s191 = ssub.s32 %s11, 1
      // Predicated region
      $region13: #{sym_cnn2d_forward.1} parent=11 // pred_check
        %p192 = pneg %p128
      $region14: #{sym_cnn2d_forward.1} parent=11 // pred_check_branch
        %194 = sbr.rel (%p192) target = $region16
      $region15: #{sym_cnn2d_forward.1} parent=11 // pred_region
        _
      $region16: #{sym_cnn2d_forward.1} parent=11 // pred_fallthru
        _
      // Predicated region
      $region17: #{sym_cnn2d_forward.1} parent=11 // pred_check
        %p195 = pneg %p149
      $region18: #{sym_cnn2d_forward.1} parent=11 // pred_check_branch
        %197 = sbr.rel (%p195) target = $region20
      $region19: #{sym_cnn2d_forward.1} parent=11 // pred_region
        _
      $region20: #{sym_cnn2d_forward.1} parent=11 // pred_fallthru
        _
    $region12: #{sym_cnn2d_forward.1} parent=5 // pred_fallthru
      _
    %p198 = scmp.lt.s32.totalorder %s11, 2
    // Predicated region
    $region21: #{sym_cnn2d_forward.1} parent=5 // pred_check
      %p199 = pneg %p198
    $region22: #{sym_cnn2d_forward.1} parent=5 // pred_check_branch
      %201 = sbr.rel (%p199) target = $region24
    $region23: #{sym_cnn2d_forward.1} parent=5 // pred_region
      // Predicated region
      $region25: #{sym_cnn2d_forward.1} parent=23 // pred_check
        %p202 = pneg %p45
      $region26: #{sym_cnn2d_forward.1} parent=23 // pred_check_branch
        %204 = sbr.rel (%p202) target = $region28
      $region27: #{sym_cnn2d_forward.1} parent=23 // pred_region
        %s205 = smul.u32 2, %s19
        %p206 = scmp.lt.s32.totalorder %s18, 1
        %s207 = scalar_select %p206, %s18, 1
        %p208 = scmp.lt.s32.totalorder %s205, 1
        %s209 = scalar_select %p208, %s205, 1
        %s210 = smul.addr %s207, 2
        %s211 = sadd.s32 %s209, %s210
        %s212 = smul.addr %s211, 4
        %s213 = scalar_lea.vmem %s0, %s212
        %s214 = smul.u32 2, %s19
      $region28: #{sym_cnn2d_forward.1} parent=23 // pred_fallthru
        _
      // Predicated region
      $region29: #{sym_cnn2d_forward.1} parent=23 // pred_check
        %p215 = pneg %p73
      $region30: #{sym_cnn2d_forward.1} parent=23 // pred_check_branch
        %217 = sbr.rel (%p215) target = $region32
      $region31: #{sym_cnn2d_forward.1} parent=23 // pred_region
        %p218 = scmp.lt.s32.totalorder %s18, 1
        %s219 = scalar_select %p218, %s18, 1
        %p220 = scmp.lt.s32.totalorder %s19, 0
        %s221 = scalar_select %p220, %s19, 0
        %s222 = sadd.s32 %s221, %s219
        %s223 = smul.addr %s222, 4
        %s224 = scalar_lea.vmem %s1, %s223
      $region32: #{sym_cnn2d_forward.1} parent=23 // pred_fallthru
        _
      // Predicated region
      $region33: #{sym_cnn2d_forward.1} parent=23 // pred_check
        %p225 = pneg %p101
      $region34: #{sym_cnn2d_forward.1} parent=23 // pred_check_branch
        %227 = sbr.rel (%p225) target = $region36
      $region35: #{sym_cnn2d_forward.1} parent=23 // pred_region
        %p228 = scmp.lt.s32.totalorder %s18, 1
        %s229 = scalar_select %p228, %s18, 1
        %p230 = scmp.lt.s32.totalorder %s19, 0
        %s231 = scalar_select %p230, %s19, 0
        %s232 = sadd.s32 %s231, %s229
        %s233 = smul.addr %s232, 4
        %s234 = scalar_lea.vmem %s2, %s233
      $region36: #{sym_cnn2d_forward.1} parent=23 // pred_fallthru
        _
    $region24: #{sym_cnn2d_forward.1} parent=5 // pred_fallthru
      _
    %p235 = scmp.le.s32.totalorder 1, %s11
    %p236 = scmp.lt.s32.totalorder %s11, 3
    %p237 = pnand %p235, %p236
    %p238 = pneg %p237
    // Predicated region
    $region37: #{sym_cnn2d_forward.1} parent=5 // pred_check
      _
    $region38: #{sym_cnn2d_forward.1} parent=5 // pred_check_branch
      %240 = sbr.rel (%p237) target = $region40
    $region39: #{sym_cnn2d_forward.1} parent=5 // pred_region
      %s241 = ssub.s32 %s11, 1
      %s242 = smul.u32 2, %s21
      %p243 = scmp.lt.s32.totalorder %s20, 1
      %s244 = scalar_select %p243, %s20, 1
      %p245 = scmp.lt.s32.totalorder %s242, 1
      %s246 = scalar_select %p245, %s242, 1
      %s247 = smul.addr %s244, 2
      %s248 = sadd.s32 %s246, %s247
      %s249 = smul.addr %s248, 4
      %s250 = scalar_lea.vmem %s0, %s249
      %p251 = pneg %p51
      %p252 = pneg %p48
      %p253 = scmp.lt.s32.totalorder %s20, 1
      %s254 = scalar_select %p253, %s20, 1
      %p255 = scmp.lt.s32.totalorder %s21, 0
      %s256 = scalar_select %p255, %s21, 0
      %s257 = sadd.s32 %s256, %s254
      %s258 = smul.addr %s257, 4
      %s259 = scalar_lea.vmem %s1, %s258
      %p260 = pneg %p79
      %p261 = pneg %p76
      %p262 = scmp.lt.s32.totalorder %s20, 1
      %s263 = scalar_select %p262, %s20, 1
      %p264 = scmp.lt.s32.totalorder %s21, 0
      %s265 = scalar_select %p264, %s21, 0
      %s266 = sadd.s32 %s265, %s263
      %s267 = smul.addr %s266, 4
      %s268 = scalar_lea.vmem %s2, %s267
      %p269 = pneg %p107
      %p270 = pneg %p104
      %p271 = pneg %p128
      %p272 = pneg %p125
      %p273 = pneg %p149
      %p274 = pneg %p146
      %p275 = pneg %p177
      %p276 = pneg %p174
      %s277 = smul.u32 2, %s21
      %p278 = scmp.lt.s32.totalorder %s20, 1
      %s279 = scalar_select %p278, %s20, 1
      %p280 = scmp.lt.s32.totalorder %s277, 1
      %s281 = scalar_select %p280, %s277, 1
      %s282 = smul.addr %s279, 2
      %s283 = sadd.s32 %s281, %s282
      %s284 = smul.addr %s283, 8
      %s285 = scalar_lea.vmem %s5, %s284
      %s286 = smul.u32 2, %s21
      %p287 = scmp.lt.s32.totalorder %s20, 1
      %s288 = scalar_select %p287, %s20, 1
      %p289 = scmp.lt.s32.totalorder %s286, 1
      %s290 = scalar_select %p289, %s286, 1
      %s291 = smul.addr %s288, 2
      %s292 = sadd.s32 %s290, %s291
      %s293 = smul.addr %s292, 4
      %s294 = scalar_lea.vmem %s0, %s293
      %s295 = smul.u32 2, %s21
      %p296 = scmp.lt.s32.totalorder %s20, 1
      %s297 = scalar_select %p296, %s20, 1
      %p298 = scmp.lt.s32.totalorder %s21, 0
      %s299 = scalar_select %p298, %s21, 0
      %s300 = sadd.s32 %s299, %s297
      %s301 = smul.addr %s300, 4
      %s302 = scalar_lea.vmem %s1, %s301
      %p303 = scmp.lt.s32.totalorder %s20, 1
      %s304 = scalar_select %p303, %s20, 1
      %p305 = scmp.lt.s32.totalorder %s21, 0
      %s306 = scalar_select %p305, %s21, 0
      %s307 = sadd.s32 %s306, %s304
      %s308 = smul.addr %s307, 4
      %s309 = scalar_lea.vmem %s2, %s308
      %s310 = smul.u32 2, %s21
      %p311 = scmp.lt.s32.totalorder %s20, 1
      %s312 = scalar_select %p311, %s20, 1
      %p313 = scmp.lt.s32.totalorder %s310, 1
      %s314 = scalar_select %p313, %s310, 1
      %s315 = smul.addr %s312, 2
      %s316 = sadd.s32 %s314, %s315
      %s317 = smul.addr %s316, 8
      %s318 = scalar_lea.vmem %s5, %s317
      %s319 = smul.u32 2, %s21
      %320 = vst [vmem:[#allocation2] sm:$0xff] 0.0
      %vm321 = vcmask 273408
      %322 = vst.msk [vmem:[#allocation2 + $0x8] sm:$0xf] %vm321, 0.0
      %v323 = vld [vmem:[%s294] sm:$0xff]
      %325 = vrot.lane.b32.xlu0 %v323, 17
      %v326 = vpop.permute.xlu0 %325
      %v327 = vrot.slane %v326, 4
      %vm328 = vcmask 138240
      %v329 = vsel %vm328, %v327, %v326
      %vm332 = vcmask 1043592
      %vm333 = vcmask 1047556
      %vm334 = vmor %vm333, %vm332
      %335 = vst.msk [vmem:[#allocation2] sm:$0xff] %vm334, %v329
      %vm336 = vcmask 134144
      %337 = vst.msk [vmem:[#allocation2 + $0x8] sm:$0xf] %vm336, %v327
      %p338 = scmp.gt.s32.totalorder %s21, 0
      // Predicated region
      $region41: #{sym_cnn2d_forward.1} parent=39 // pred_check
        %p339 = pneg %p338
      $region42: #{sym_cnn2d_forward.1} parent=39 // pred_check_branch
        %341 = sbr.rel (%p339) target = $region44
      $region43: #{sym_cnn2d_forward.1} parent=39 // pred_region
        %v342 = vld [vmem:[%s302] sm:$0xf]
        %344 = vrot.lane.b32.xlu0 %v342, 1
        %v345 = vpop.permute.xlu0 %344
        %vm347 = vcmask 134152
        %348 = vst.msk [vmem:[#allocation2] sm:$0xf] %vm347, %v345
      $region44: #{sym_cnn2d_forward.1} parent=39 // pred_fallthru
        _
      %p349 = scmp.lt.s32.totalorder %s21, 0
      // Predicated region
      $region45: #{sym_cnn2d_forward.1} parent=39 // pred_check
        %p350 = pneg %p349
      $region46: #{sym_cnn2d_forward.1} parent=39 // pred_check_branch
        %352 = sbr.rel (%p350) target = $region48
      $region47: #{sym_cnn2d_forward.1} parent=39 // pred_region
        %v353 = vld [vmem:[%s309] sm:$0xf]
        %355 = vrot.lane.b32.xlu0 %v353, 17
        %v356 = vpop.permute.xlu0 %355
        %vm358 = vcmask 265352
        %359 = vst.msk [vmem:[#allocation2 + $0x8] sm:$0xf] %vm358, %v356
      $region48: #{sym_cnn2d_forward.1} parent=39 // pred_fallthru
        _
      %v360 = vlaneseq
      %v361 = vand.u32 %v360, 127
      %v362 = vadd.s32 %v361, 128
      %v363 = vand.u32 %v361, 15
      %v364 = vand.u32 %v362, 15
      %vm365 = vcmp.ne.s32.totalorder %v363, 0
      %vm366 = vcmp.ne.s32.totalorder %v364, 0
      %vm367 = vcmp.ne.s32.totalorder %v363, 15
      %vm368 = vcmp.ne.s32.totalorder %v364, 15
      %v369 = vld [vmem:[#allocation2] sm:$0xff]
      %v370 = vsel %vm365, 1, 0
      %v371 = vsel %vm366, 1, 0
      %vm372 = vcmp.eq.s32.totalorder %v370, 1
      %vm373 = vcmp.eq.s32.totalorder %v371, 1
      %v375 = vcombine.high %v369, %v369
      %v377 = vsel %vm372, %v369, 0.0
      %v378 = vsel %vm373, %v375, 0.0
      %379 = vst [vmem:[#allocation3] sm:$0xf] %v377
      %380 = vst [vmem:[#allocation3 + $0x8] sm:$0xf] %v378
      %v381 = vld [vmem:[#allocation2] sm:$0xff]
      %v382 = vld [vmem:[#allocation2 + $0x8] sm:$0xf]
      %v385 = vcombine.low %v381, %v381
      %v386 = vcombine.low %v382, %v382
      %387 = vrot.lane.b32.xlu0 %v385, 127
      %v388 = vpop.permute.xlu0 %387
      %389 = vrot.lane.b32.xlu0 %v381, 127
      %v390 = vpop.permute.xlu0 %389
      %391 = vrot.lane.b32.xlu0 %v386, 127
      %v392 = vpop.permute.xlu0 %391
      %vm393 = vcmask 1039360
      %v394 = vsel %vm393, %v388, %v390
      %v395 = vsel %vm393, %v390, %v392
      %398 = vst [vmem:[#allocation3] sm:$0xf0] %v394
      %399 = vst [vmem:[#allocation3 + $0x8] sm:$0xf0] %v395
      %v400 = vld [vmem:[#allocation2] sm:$0xff]
      %v401 = vld [vmem:[#allocation2 + $0x8] sm:$0xf]
      %v402 = vsel %vm367, 1, 0
      %v403 = vsel %vm368, 1, 0
      %vm404 = vcmp.eq.s32.totalorder %v402, 1
      %vm405 = vcmp.eq.s32.totalorder %v403, 1
      %v408 = vcombine.high %v400, %v400
      %409 = vrot.lane.b32.xlu0 %v400, 126
      %v410 = vpop.permute.xlu0 %409
      %411 = vrot.lane.b32.xlu0 %v408, 126
      %v412 = vpop.permute.xlu0 %411
      %413 = vrot.lane.b32.xlu0 %v401, 126
      %v414 = vpop.permute.xlu0 %413
      %vm415 = vcmask 1031168
      %v416 = vsel %vm415, %v410, %v412
      %v417 = vsel %vm415, %v412, %v414
      %v420 = vsel %vm404, %v416, 0.0
      %v421 = vsel %vm405, %v417, 0.0
      %422 = vst [vmem:[#allocation3 + $0x10] sm:$0xf] %v420
      %423 = vst [vmem:[#allocation3 + $0x18] sm:$0xf] %v421
      %v424 = vld [vmem:[#allocation2] sm:$0xff]
      %v425 = vld [vmem:[#allocation2 + $0x8] sm:$0xf]
      %v428 = vcombine.high %v424, %v424
      %429 = vrot.lane.b32.xlu0 %v424, 112
      %v430 = vpop.permute.xlu0 %429
      %431 = vrot.lane.b32.xlu0 %v428, 112
      %v432 = vpop.permute.xlu0 %431
      %433 = vrot.lane.b32.xlu0 %v425, 112
      %v434 = vpop.permute.xlu0 %433
      %vm435 = vcmask 916480
      %v436 = vsel %vm435, %v430, %v432
      %v437 = vsel %vm435, %v432, %v434
      %v440 = vsel %vm372, %v436, 0.0
      %v441 = vsel %vm373, %v437, 0.0
      %v444 = vrot.slane %v440, 4
      %v445 = vrot.slane %v441, 4
      %448 = vst [vmem:[#allocation3 + $0x10] sm:$0xf0] %v444
      %449 = vst [vmem:[#allocation3 + $0x18] sm:$0xf0] %v445
      %v450 = vld [vmem:[#allocation2] sm:$0xff]
      %v451 = vld [vmem:[#allocation2 + $0x8] sm:$0xf]
      %v454 = vcombine.high %v450, %v450
      %455 = vrot.lane.b32.xlu0 %v450, 111
      %v456 = vpop.permute.xlu0 %455
      %457 = vrot.lane.b32.xlu0 %v454, 111
      %v458 = vpop.permute.xlu0 %457
      %459 = vrot.lane.b32.xlu0 %v451, 111
      %v460 = vpop.permute.xlu0 %459
      %vm461 = vcmask 908288
      %v462 = vsel %vm461, %v456, %v458
      %v463 = vsel %vm461, %v458, %v460
      %466 = vst [vmem:[#allocation3 + $0x20] sm:$0xf] %v462
      %467 = vst [vmem:[#allocation3 + $0x28] sm:$0xf] %v463
      %v468 = vld [vmem:[#allocation2] sm:$0xff]
      %v469 = vld [vmem:[#allocation2 + $0x8] sm:$0xf]
      %v472 = vcombine.high %v468, %v468
      %473 = vrot.lane.b32.xlu0 %v468, 110
      %v474 = vpop.permute.xlu0 %473
      %475 = vrot.lane.b32.xlu0 %v472, 110
      %v476 = vpop.permute.xlu0 %475
      %477 = vrot.lane.b32.xlu0 %v469, 110
      %v478 = vpop.permute.xlu0 %477
      %vm479 = vcmask 900096
      %v480 = vsel %vm479, %v474, %v476
      %v481 = vsel %vm479, %v476, %v478
      %v484 = vsel %vm404, %v480, 0.0
      %v485 = vsel %vm405, %v481, 0.0
      %v488 = vrot.slane %v484, 4
      %v489 = vrot.slane %v485, 4
      %492 = vst [vmem:[#allocation3 + $0x20] sm:$0xf0] %v488
      %493 = vst [vmem:[#allocation3 + $0x28] sm:$0xf0] %v489
      %v494 = vld [vmem:[#allocation2] sm:$0xff]
      %v495 = vld [vmem:[#allocation2 + $0x8] sm:$0xf]
      %v498 = vcombine.high %v494, %v494
      %499 = vrot.lane.b32.xlu0 %v494, 96
      %v500 = vpop.permute.xlu0 %499
      %501 = vrot.lane.b32.xlu0 %v498, 96
      %v502 = vpop.permute.xlu0 %501
      %503 = vrot.lane.b32.xlu0 %v495, 96
      %v504 = vpop.permute.xlu0 %503
      %vm505 = vcmask 785408
      %v506 = vsel %vm505, %v500, %v502
      %v507 = vsel %vm505, %v502, %v504
      %v510 = vsel %vm372, %v506, 0.0
      %v511 = vsel %vm373, %v507, 0.0
      %512 = vst [vmem:[#allocation3 + $0x30] sm:$0xf] %v510
      %513 = vst [vmem:[#allocation3 + $0x38] sm:$0xf] %v511
      %v514 = vld [vmem:[#allocation2] sm:$0xff]
      %v515 = vld [vmem:[#allocation2 + $0x8] sm:$0xf]
      %v518 = vcombine.low %v514, %v514
      %v519 = vcombine.low %v515, %v515
      %520 = vrot.lane.b32.xlu0 %v518, 95
      %v521 = vpop.permute.xlu0 %520
      %522 = vrot.lane.b32.xlu0 %v514, 95
      %v523 = vpop.permute.xlu0 %522
      %524 = vrot.lane.b32.xlu0 %v519, 95
      %v525 = vpop.permute.xlu0 %524
      %vm526 = vcmask 777216
      %v527 = vsel %vm526, %v521, %v523
      %v528 = vsel %vm526, %v523, %v525
      %531 = vst [vmem:[#allocation3 + $0x30] sm:$0xf0] %v527
      %532 = vst [vmem:[#allocation3 + $0x38] sm:$0xf0] %v528
      %v533 = vld [vmem:[#allocation2] sm:$0xff]
      %v534 = vld [vmem:[#allocation2 + $0x8] sm:$0xf]
      %v537 = vcombine.high %v533, %v533
      %538 = vrot.lane.b32.xlu0 %v533, 94
      %v539 = vpop.permute.xlu0 %538
      %540 = vrot.lane.b32.xlu0 %v537, 94
      %v541 = vpop.permute.xlu0 %540
      %542 = vrot.lane.b32.xlu0 %v534, 94
      %v543 = vpop.permute.xlu0 %542
      %vm544 = vcmask 769024
      %v545 = vsel %vm544, %v539, %v541
      %v546 = vsel %vm544, %v541, %v543
      %v549 = vsel %vm404, %v545, 0.0
      %v550 = vsel %vm405, %v546, 0.0
      %551 = vst [vmem:[#allocation3 + $0x40] sm:$0xf] %v549
      %552 = vst [vmem:[#allocation3 + $0x48] sm:$0xf] %v550
      %v553 = vld [vmem:[%s3] sm:$0xff]
      %v554 = vld [vmem:[#allocation3] sm:$0xff]
      %v555 = vld [vmem:[#allocation3 + $0x8] sm:$0xff]
      %v556 = vld [vmem:[#allocation3 + $0x10] sm:$0xff]
      %v557 = vld [vmem:[#allocation3 + $0x18] sm:$0xff]
      %v558 = vld [vmem:[#allocation3 + $0x20] sm:$0xff]
      %v559 = vld [vmem:[#allocation3 + $0x28] sm:$0xff]
      %v560 = vld [vmem:[#allocation3 + $0x30] sm:$0xff]
      %v561 = vld [vmem:[#allocation3 + $0x38] sm:$0xff]
      %v562 = vld [vmem:[#allocation3 + $0x40] sm:$0xf]
      %v563 = vld [vmem:[#allocation3 + $0x48] sm:$0xf]
      %v564 = vld [vmem:[%s4] sm:$0xff]
      %566 = vset.pattern.permute.xlu0 0
      %567 = vperm.xlu0 %566, %v564
      %v568 = vpop.permute.xlu0 %567
      %vm570 = vcmask 293888
      %v572 = vsel %vm570, %v553, 0
      %vm574 = vcmask 1043456
      %v576 = vsel %vm574, %v562, 0
      %v579 = vsel %vm574, %v563, 0
      %581 = vmatprep.subr.mxu0 %v555
      %582 = vmatpush1.msra.mxu0 %v554
      %583 = vmatprep.subr.mxu0 %v557
      %584 = vmatpush1.msra.mxu0 %v556
      %585 = vmatprep.subr.mxu0 %v559
      %586 = vmatpush1.msra.mxu0 %v558
      %587 = vmatprep.subr.mxu0 %v561
      %588 = vmatpush1.msra.mxu0 %v560
      %589 = vmatprep.subr.mxu0 %v579
      %590 = vmatpush1.msra.mxu0 %v576
      %591 = vmatprep.subr.mxu0 0.0
      %592 = vmatpush1.msra.mxu0 0.0
      %593 = vmatprep.subr.mxu0 0.0
      %594 = vmatpush1.msra.mxu0 0.0
      %595 = vmatprep.subr.mxu0 0.0
      %596 = vmatpush1.msra.mxu0 0.0
      %597 = vmatprep.subr.mxu0 0.0
      %598 = vmatpush1.msra.mxu0 0.0
      %599 = vmatprep.subr.mxu0 0.0
      %600 = vmatpush1.msra.mxu0 0.0
      %601 = vmatprep.subr.mxu0 0.0
      %602 = vmatpush1.msra.mxu0 0.0
      %603 = vmatprep.subr.mxu0 0.0
      %604 = vmatpush1.msra.mxu0 0.0
      %605 = vmatprep.subr.mxu0 0.0
      %606 = vmatpush1.msra.mxu0 0.0
      %607 = vmatprep.subr.mxu0 0.0
      %608 = vmatpush1.msra.mxu0 0.0
      %609 = vmatprep.subr.mxu0 0.0
      %610 = vmatpush1.msra.mxu0 0.0
      %611 = vmatprep.subr.mxu0 0.0
      %612 = vmatpush1.msra.mxu0 0.0
      %613 = vmatprep.subr.mxu0 0.0
      %614 = vmatpush1.msra.mxu0 0.0
      %615 = vmatprep.subr.mxu0 0.0
      %616 = vmatpush1.msra.mxu0 0.0
      %617 = vmatprep.subr.mxu0 0.0
      %618 = vmatpush1.msra.mxu0 0.0
      %619 = vmatprep.subr.mxu0 0.0
      %620 = vmatpush1.msra.mxu0 0.0
      %621 = vmatprep.subr.mxu0 0.0
      %622 = vmatpush1.msra.mxu0 0.0
      %623 = vmatprep.subr.mxu0 0.0
      %624 = vmatpush1.msra.mxu0 0.0
      %625 = vmatprep.subr.mxu0 0.0
      %626 = vmatpush1.msra.mxu0 0.0
      %627 = vmatprep.subr.mxu0 0.0
      %628 = vmatpush1.msra.mxu0 0.0
      %629 = vmatprep.subr.mxu0 0.0
      %630 = vmatpush1.msra.mxu0 0.0
      %631 = vmatprep.subr.mxu0 0.0
      %632 = vmatpush1.msra.mxu0 0.0
      %633 = vmatprep.subr.mxu0 0.0
      %634 = vmatpush1.msra.mxu0 0.0
      %635 = vmatprep.subr.mxu0 0.0
      %636 = vmatpush1.msra.mxu0 0.0
      %637 = vmatprep.subr.mxu0 0.0
      %638 = vmatpush1.msra.mxu0 0.0
      %639 = vmatprep.subr.mxu0 0.0
      %640 = vmatpush1.msra.mxu0 0.0
      %641 = vmatprep.subr.mxu0 0.0
      %642 = vmatpush1.msra.mxu0 0.0
      %643 = vmatprep.subr.mxu0 0.0
      %644 = vmatpush1.msra.mxu0 0.0
      %645 = vmatprep.mubr.f32.mxu0 0.0
      %646 = vmatmul.mubr.f32.gmra.mrb[0].mxu0 %v572
      %v647 = vpop.f32.mrb[0].mxu0
      %v648 = vadd.f32 %v568, %v647
      %v649 = vpop.f32.mrb[0].mxu0
      %v650 = vadd.f32 %v568, %v649
      %651 = vdwg.mxu0
      %v652 = vmax.f32 %v648, 0.0
      %v653 = vmax.f32 %v650, 0.0
      %654 = vst [vmem:[%s318] sm:$0xff] %v652
      %655 = vst [vmem:[%s318 + $0x8] sm:$0xff] %v653
      %s656 = smul.u32 2, %s21
      %p657 = scmp.lt.s32.totalorder %s20, 1
      %s658 = scalar_select %p657, %s20, 1
      %p659 = scmp.lt.s32.totalorder %s656, 1
      %s660 = scalar_select %p659, %s656, 1
      %s661 = smul.addr %s658, 2
      %s662 = sadd.s32 %s660, %s661
      %s663 = smul.addr %s662, 8
      %s664 = scalar_lea.vmem %s5, %s663
      // Predicated region
      $region49: #{sym_cnn2d_forward.1} parent=39 // pred_check
        %p665 = pneg %p174
      $region50: #{sym_cnn2d_forward.1} parent=39 // pred_check_branch
        %667 = sbr.rel (%p665) target = $region52
      $region51: #{sym_cnn2d_forward.1} parent=39 // pred_region
        %s668 = smul.u32 2, %s21
      $region52: #{sym_cnn2d_forward.1} parent=39 // pred_fallthru
        _
    $region40: #{sym_cnn2d_forward.1} parent=5 // pred_fallthru
      _
    %p669 = scmp.le.s32.totalorder 2, %s11
    // Predicated region
    $region53: #{sym_cnn2d_forward.1} parent=5 // pred_check
      %p670 = pneg %p669
    $region54: #{sym_cnn2d_forward.1} parent=5 // pred_check_branch
      %672 = sbr.rel (%p670) target = $region56
    $region55: #{sym_cnn2d_forward.1} parent=5 // pred_region
      %s673 = ssub.s32 %s11, 2
      // Predicated region
      $region57: #{sym_cnn2d_forward.1} parent=55 // pred_check
        %p674 = pneg %p180
      $region58: #{sym_cnn2d_forward.1} parent=55 // pred_check_branch
        %676 = sbr.rel (%p674) target = $region60
      $region59: #{sym_cnn2d_forward.1} parent=55 // pred_region
        %s677 = smul.u32 2, %s23
        %p678 = scmp.lt.s32.totalorder %s22, 1
        %s679 = scalar_select %p678, %s22, 1
        %p680 = scmp.lt.s32.totalorder %s677, 1
        %s681 = scalar_select %p680, %s677, 1
        %s682 = smul.addr %s679, 2
        %s683 = sadd.s32 %s681, %s682
        %s684 = smul.addr %s683, 8
        %s685 = scalar_lea.vmem %s5, %s684
      $region60: #{sym_cnn2d_forward.1} parent=55 // pred_fallthru
        _
    $region56: #{sym_cnn2d_forward.1} parent=5 // pred_fallthru
      _
  $region6: #{sym_cnn2d_forward.1} parent=0 // loop_footer
    %s15 = sadd.s32 1, %s11
  $region7: #{sym_cnn2d_forward.1} parent=0 // loop_footer_branch
    %10 = sbr.rel target = $region3
  $region8: #{sym_cnn2d_forward.1} parent=0 // loop_exit
    _

</llo_original>
